<compile_context>
chip_gen: v7x
topology: tpu7x:2x2x1
jax: 0.10.0
libtpu: 0.0.40
codegen_flags: <defaults>
</compile_context>

<pallas_src>
import functools

import jax
import jax.numpy as jnp
from jax import lax
from jax.experimental import pallas as pl
from jax.experimental.pallas import tpu as pltpu


def _round_up(x, m):
    return (x + m - 1) // m * m


def _infonce_kernel(rowb_ref, colb_ref, rowf_ref, parf_ref, out_ref, denom_ref,
                    *, bs, bs_pad, tm, tn, inv_t):
    # rowb_ref : VMEM (tm, D_pad) bf16  normalized rows of this row block (lhs)
    # colb_ref : VMEM (tn, D_pad) bf16  normalized rows of this column block (rhs)
    # rowf_ref : VMEM (tm, D_pad) f32   same row block, full precision (positives)
    # parf_ref : VMEM (tm, D_pad) f32   partner rows ((i + bs) mod N), full precision
    # out_ref  : VMEM (tm, 128)   f32   per-row loss (broadcast over lanes)
    # denom_ref: VMEM (tm, 1)     f32   running denominator (scratch, resident)
    i = pl.program_id(0)
    j = pl.program_id(1)
    n_col_steps = pl.num_programs(1)

    @pl.when(j == 0)
    def _():
        denom_ref[...] = jnp.zeros_like(denom_ref)

    # (tm, tn) similarity tile on the MXU: bf16 operands, f32 accumulation.
    # Contract the feature axis of BOTH operands (A @ B^T without materializing
    # a transposed copy of the column block).
    sim = lax.dot_general(rowb_ref[...], colb_ref[...],
                          dimension_numbers=(((1,), (1,)), ((), ())),
                          preferred_element_type=jnp.float32)     # (tm, tn) f32

    row0 = i * tm
    col0 = j * tn
    col = col0 + lax.broadcasted_iota(jnp.int32, (tm, tn), 1)
    row = row0 + lax.broadcasted_iota(jnp.int32, (tm, tn), 0)
    keep = col != row                                  # exclude diagonal (exact)
    if bs != bs_pad:                                   # static: padded columns exist
        keep &= (col < bs) | ((col >= bs_pad) & (col < bs_pad + bs))
    # exp argument shifted by the cosine-similarity bound (1.0) -> always <= ~0.
    e = jnp.where(keep, jnp.exp((sim - 1.0) * inv_t), 0.0)
    denom_ref[...] += jnp.sum(e, axis=-1, keepdims=True)

    @pl.when(j == n_col_steps - 1)
    def _():
        # positives[i] = cos(rep_i, rep_{(i+bs) mod N}), kept in f32 (O(tm*D)).
        pos = jnp.sum(rowf_ref[...] * parf_ref[...], axis=-1, keepdims=True)
        loss_rows = (1.0 - pos) * inv_t + jnp.log(denom_ref[...])   # (tm, 1)
        if bs != bs_pad:                               # zero out padded rows
            grow = row0 + lax.broadcasted_iota(jnp.int32, (tm, 1), 0)
            row_valid = (grow < bs) | ((grow >= bs_pad) & (grow < bs_pad + bs))
            loss_rows = jnp.where(row_valid, loss_rows, 0.0)
        out_ref[...] = jnp.broadcast_to(loss_rows, (tm, 128))


def infonce_loss(z_i, z_j, temperature=0.1, block_rows=256):
    """Pallas-backed InfoNCE loss. z_i, z_j: (batch, feature)."""
    assert z_i.ndim == 2 and z_i.shape == z_j.shape
    bs, d = z_i.shape
    d_pad = _round_up(d, 128)                           # lane-dense feature axis
    tm = max(8, min(_round_up(block_rows, 8), _round_up(bs, 8)))
    bs_pad = _round_up(bs, tm)                          # each half padded to tm multiple
    n_pad = 2 * bs_pad
    nb_rows = n_pad // tm
    half_blocks = bs_pad // tm
    tn = min(2 * tm, n_pad)                             # column tile (divides n_pad)
    nb_cols = n_pad // tn
    assert n_pad % tn == 0 and bs_pad % tm == 0

    def _pad(x):
        return jnp.pad(x.astype(jnp.float32), ((0, bs_pad - bs), (0, d_pad - d)))

    reps = jnp.concatenate([_pad(z_i), _pad(z_j)], axis=0)        # (n_pad, d_pad) f32
    # L2-normalize once in the wrapper; eps**2 clamp on |x|^2 matches
    # F.cosine_similarity's eps=1e-8 clamp on |x|.  Zero-padded rows stay zero.
    ss = jnp.sum(reps * reps, axis=-1, keepdims=True)
    rn_f32 = reps * lax.rsqrt(jnp.maximum(ss, 1e-16))
    rn_bf16 = rn_f32.astype(jnp.bfloat16)               # MXU operands

    # Generation-aware VMEM budget (<= 75% of per-core capacity; v7x = 64 MiB).
    vmem_est = (2 * (tm * d_pad * 2)                    # bf16 row block (double buffer)
                + 2 * (tn * d_pad * 2)                  # bf16 col block (double buffer)
                + 2 * 2 * (tm * d_pad * 4)              # f32 row + partner blocks
                + 2 * (tm * 128 * 4)                    # output block
                + tm * 4                                # denominator scratch
                + 8 * tm * tn * 4)                      # sim/exp/mask/iota temporaries
    try:
        vmem_cap = int(pltpu.get_tpu_info().vmem_capacity_bytes)
    except Exception:
        vmem_cap = 64 * 1024 * 1024                     # conservative (v7x per-TC)
    vmem_limit = int(min(max(int(1.25 * vmem_est), 32 * 1024 * 1024),
                         int(0.75 * vmem_cap)))

    kernel = functools.partial(_infonce_kernel, bs=bs, bs_pad=bs_pad, tm=tm, tn=tn,
                               inv_t=1.0 / float(temperature))
    out = pl.pallas_call(
        kernel,
        out_shape=jax.ShapeDtypeStruct((n_pad, 128), jnp.float32),
        grid=(nb_rows, nb_cols),
        in_specs=[
            pl.BlockSpec((tm, d_pad), lambda i, j: (i, 0)),           # bf16 row block
            pl.BlockSpec((tn, d_pad), lambda i, j: (j, 0)),           # bf16 col block
            pl.BlockSpec((tm, d_pad), lambda i, j: (i, 0)),           # f32 row block
            pl.BlockSpec((tm, d_pad),
                         lambda i, j: ((i + half_blocks) % nb_rows, 0)),  # f32 partner
        ],
        out_specs=pl.BlockSpec((tm, 128), lambda i, j: (i, 0)),
        scratch_shapes=[pltpu.VMEM((tm, 1), jnp.float32)],            # denominator
        compiler_params=pltpu.CompilerParams(
            dimension_semantics=("parallel", "arbitrary"),            # rows shard on v7x
            vmem_limit_bytes=vmem_limit),
    )(rn_bf16, rn_bf16, rn_f32, rn_f32)
    # Padded rows were zeroed in-kernel; per-row losses live in lane 0.
    return jnp.sum(out[:, 0]) / (2.0 * bs)


def _infonce_ref(z_i, z_j, temperature=0.1):
    """Pure-JAX reference mirroring the PyTorch module, for verification."""
    bs = z_i.shape[0]
    reps = jnp.concatenate([z_i, z_j], axis=0).astype(jnp.float32)
    n = reps / jnp.maximum(jnp.linalg.norm(reps, axis=-1, keepdims=True), 1e-8)
    sim = jnp.matmul(n, n.T, precision=lax.Precision.HIGHEST)
    sim_ij = jnp.diagonal(sim, offset=bs)
    sim_ji = jnp.diagonal(sim, offset=-bs)
    positives = jnp.concatenate([sim_ij, sim_ji], axis=0)
    neg_mask = (~jnp.eye(2 * bs, dtype=bool)).astype(jnp.float32)
    nominator = jnp.exp(positives / temperature)
    denominator = jnp.sum(neg_mask * jnp.exp(sim / temperature), axis=1)
    return jnp.sum(-jnp.log(nominator / denominator)) / (2 * bs)


if __name__ == "__main__":
    key = jax.random.PRNGKey(0)
    k1, k2 = jax.random.split(key)
    bs, dim = 12, 48   # exercises feature padding (48->128) and row padding (12->16)
    z_i = jax.random.normal(k1, (bs, dim), dtype=jnp.float32)
    z_j = jax.random.normal(k2, (bs, dim), dtype=jnp.float32)

    loss = infonce_loss(z_i, z_j, temperature=0.1)
    jax.block_until_ready(loss)

    ref = _infonce_ref(z_i, z_j, temperature=0.1)
    # bf16 MXU operands -> loosened tolerance (positives dot stays f32).
    assert jnp.allclose(loss, ref, rtol=3e-2, atol=3e-2), (loss, ref)

    print("KERNEL_OK")
</pallas_src>

<mosaic_0001>
module attributes {stable_mosaic.version = 11 : i64} {
  func.func @_infonce_kernel(%arg0: i32, %arg1: i32, %arg2: memref<16x128xbf16, #tpu.memory_space<vmem>>, %arg3: memref<32x128xbf16, #tpu.memory_space<vmem>>, %arg4: memref<16x128xf32, #tpu.memory_space<vmem>>, %arg5: memref<16x128xf32, #tpu.memory_space<vmem>>, %arg6: memref<16x128xf32, #tpu.memory_space<vmem>>, %arg7: memref<16x1xf32, #tpu.memory_space<vmem>>) attributes {dimension_semantics = [#tpu.dimension_semantics<parallel>, #tpu.dimension_semantics<arbitrary>], iteration_bounds = array<i64: 2, 1>, scalar_prefetch = 0 : i64, scratch_operands = 1 : i64, tpu.core_type = #tpu.core_type<tc>, window_params = [{transform_indices = @transform_0, window_bounds = array<i64: 16, 128>}, {transform_indices = @transform_1, window_bounds = array<i64: 32, 128>}, {transform_indices = @transform_2, window_bounds = array<i64: 16, 128>}, {transform_indices = @transform_3, window_bounds = array<i64: 16, 128>}, {transform_indices = @transform_4, window_bounds = array<i64: 16, 128>}]} {
    %c0_i32 = arith.constant 0 : i32
    %0 = arith.cmpi eq, %arg1, %c0_i32 : i32
    %1 = arith.extui %0 : i1 to i32
    %c0_i32_0 = arith.constant 0 : i32
    %2 = arith.cmpi ne, %1, %c0_i32_0 : i32
    scf.if %2 {
      %cst_15 = arith.constant 0.000000e+00 : f32
      %39 = vector.broadcast %cst_15 : f32 to vector<16x1xf32>
      %c0_16 = arith.constant 0 : index
      %c0_17 = arith.constant 0 : index
      %40 = vector.load %arg7[%c0_16, %c0_17] : memref<16x1xf32, #tpu.memory_space<vmem>>, vector<16x1xf32>
      tpu.vector_store %arg7[%c0_16, %c0_17], %39 {strides = array<i32>} : memref<16x1xf32, #tpu.memory_space<vmem>>, vector<16x1xf32>,
    } else {
    }
    %c0 = arith.constant 0 : index
    %c0_1 = arith.constant 0 : index
    %3 = vector.load %arg2[%c0, %c0_1] : memref<16x128xbf16, #tpu.memory_space<vmem>>, vector<16x128xbf16>
    %c0_2 = arith.constant 0 : index
    %c0_3 = arith.constant 0 : index
    %4 = vector.load %arg3[%c0_2, %c0_3] : memref<32x128xbf16, #tpu.memory_space<vmem>>, vector<32x128xbf16>
    %cst = arith.constant dense<0.000000e+00> : vector<16x32xf32>
    %5 = tpu.matmul %3, %4, %cst {dimension_numbers = #tpu.dot_dimension_numbers<[1], [1], [0], [0], [0, 0, 1, 0], [], []>} : vector<16x128xbf16>, vector<32x128xbf16>, vector<16x32xf32> -> vector<16x32xf32>
    %c16_i32 = arith.constant 16 : i32
    %6 = arith.muli %arg0, %c16_i32 : i32
    %c32_i32 = arith.constant 32 : i32
    %7 = arith.muli %arg1, %c32_i32 : i32
    %8 = tpu.iota {dimensions = array<i32: 1>} : vector<16x32xi32>
    %9 = vector.broadcast %7 : i32 to vector<16x32xi32>
    %10 = arith.addi %9, %8 : vector<16x32xi32>
    %11 = tpu.iota {dimensions = array<i32: 0>} : vector<16x32xi32>
    %12 = vector.broadcast %6 : i32 to vector<16x32xi32>
    %13 = arith.addi %12, %11 : vector<16x32xi32>
    %14 = arith.cmpi ne, %10, %13 : vector<16x32xi32>
    %c12_i32 = arith.constant 12 : i32
    %15 = vector.broadcast %c12_i32 : i32 to vector<16x32xi32>
    %16 = arith.cmpi slt, %10, %15 : vector<16x32xi32>
    %c16_i32_4 = arith.constant 16 : i32
    %17 = vector.broadcast %c16_i32_4 : i32 to vector<16x32xi32>
    %18 = arith.cmpi sge, %10, %17 : vector<16x32xi32>
    %c28_i32 = arith.constant 28 : i32
    %19 = vector.broadcast %c28_i32 : i32 to vector<16x32xi32>
    %20 = arith.cmpi slt, %10, %19 : vector<16x32xi32>
    %21 = arith.andi %18, %20 : vector<16x32xi1>
    %22 = arith.ori %16, %21 : vector<16x32xi1>
    %23 = arith.andi %14, %22 : vector<16x32xi1>
    %cst_5 = arith.constant 1.000000e+00 : f32
    %24 = vector.broadcast %cst_5 : f32 to vector<16x32xf32>
    %25 = arith.subf %5, %24 : vector<16x32xf32>
    %cst_6 = arith.constant 1.000000e+01 : f32
    %26 = vector.broadcast %cst_6 : f32 to vector<16x32xf32>
    %27 = arith.mulf %25, %26 : vector<16x32xf32>
    %28 = math.exp %27 : vector<16x32xf32>
    %cst_7 = arith.constant 0.000000e+00 : f32
    %29 = vector.broadcast %cst_7 : f32 to vector<16x32xf32>
    %30 = arith.select %23, %28, %29 : vector<16x32xi1>, vector<16x32xf32>
    %c0_8 = arith.constant 0 : index
    %c0_9 = arith.constant 0 : index
    %31 = vector.load %arg7[%c0_8, %c0_9] : memref<16x1xf32, #tpu.memory_space<vmem>>, vector<16x1xf32>
    %cst_10 = arith.constant dense<0.000000e+00> : vector<16xf32>
    %32 = vector.multi_reduction <add>, %30, %cst_10 [1] : vector<16x32xf32> to vector<16xf32>
    %33 = vector.shape_cast %32 : vector<16xf32> to vector<16x1xf32>
    %34 = arith.addf %31, %33 : vector<16x1xf32>
    %c0_11 = arith.constant 0 : index
    %c0_12 = arith.constant 0 : index
    %35 = vector.load %arg7[%c0_11, %c0_12] : memref<16x1xf32, #tpu.memory_space<vmem>>, vector<16x1xf32>
    tpu.vector_store %arg7[%c0_11, %c0_12], %34 {strides = array<i32>} : memref<16x1xf32, #tpu.memory_space<vmem>>, vector<16x1xf32>,
    %c0_i32_13 = arith.constant 0 : i32
    %36 = arith.cmpi eq, %arg1, %c0_i32_13 : i32
    %37 = arith.extui %36 : i1 to i32
    %c0_i32_14 = arith.constant 0 : i32
    %38 = arith.cmpi ne, %37, %c0_i32_14 : i32
    scf.if %38 {
      %c0_15 = arith.constant 0 : index
      %c0_16 = arith.constant 0 : index
      %39 = vector.load %arg4[%c0_15, %c0_16] : memref<16x128xf32, #tpu.memory_space<vmem>>, vector<16x128xf32>
      %c0_17 = arith.constant 0 : index
      %c0_18 = arith.constant 0 : index
      %40 = vector.load %arg5[%c0_17, %c0_18] : memref<16x128xf32, #tpu.memory_space<vmem>>, vector<16x128xf32>
      %41 = arith.mulf %39, %40 : vector<16x128xf32>
      %cst_19 = arith.constant dense<0.000000e+00> : vector<16xf32>
      %42 = vector.multi_reduction <add>, %41, %cst_19 [1] : vector<16x128xf32> to vector<16xf32>
      %43 = vector.shape_cast %42 : vector<16xf32> to vector<16x1xf32>
      %cst_20 = arith.constant 1.000000e+00 : f32
      %44 = vector.broadcast %cst_20 : f32 to vector<16x1xf32>
      %45 = arith.subf %44, %43 : vector<16x1xf32>
      %cst_21 = arith.constant 1.000000e+01 : f32
      %46 = vector.broadcast %cst_21 : f32 to vector<16x1xf32>
      %47 = arith.mulf %45, %46 : vector<16x1xf32>
      %c0_22 = arith.constant 0 : index
      %c0_23 = arith.constant 0 : index
      %48 = vector.load %arg7[%c0_22, %c0_23] : memref<16x1xf32, #tpu.memory_space<vmem>>, vector<16x1xf32>
      %49 = math.log %48 : vector<16x1xf32>
      %50 = arith.addf %47, %49 : vector<16x1xf32>
      %51 = tpu.iota {dimensions = array<i32: 0>} : vector<16x1xi32>
      %52 = vector.broadcast %6 : i32 to vector<16x1xi32>
      %53 = arith.addi %52, %51 : vector<16x1xi32>
      %c12_i32_24 = arith.constant 12 : i32
      %54 = vector.broadcast %c12_i32_24 : i32 to vector<16x1xi32>
      %55 = arith.cmpi slt, %53, %54 : vector<16x1xi32>
      %c16_i32_25 = arith.constant 16 : i32
      %56 = vector.broadcast %c16_i32_25 : i32 to vector<16x1xi32>
      %57 = arith.cmpi sge, %53, %56 : vector<16x1xi32>
      %c28_i32_26 = arith.constant 28 : i32
      %58 = vector.broadcast %c28_i32_26 : i32 to vector<16x1xi32>
      %59 = arith.cmpi slt, %53, %58 : vector<16x1xi32>
      %60 = arith.andi %57, %59 : vector<16x1xi1>
      %61 = arith.ori %55, %60 : vector<16x1xi1>
      %cst_27 = arith.constant 0.000000e+00 : f32
      %62 = vector.broadcast %cst_27 : f32 to vector<16x1xf32>
      %63 = arith.select %61, %50, %62 : vector<16x1xi1>, vector<16x1xf32>
      %64 = vector.shape_cast %63 : vector<16x1xf32> to vector<16x1xf32>
      %65 = vector.broadcast %64 : vector<16x1xf32> to vector<16x128xf32>
      %c0_28 = arith.constant 0 : index
      %c0_29 = arith.constant 0 : index
      %66 = vector.load %arg6[%c0_28, %c0_29] : memref<16x128xf32, #tpu.memory_space<vmem>>, vector<16x128xf32>
      tpu.vector_store %arg6[%c0_28, %c0_29], %65 {strides = array<i32>} : memref<16x128xf32, #tpu.memory_space<vmem>>, vector<16x128xf32>,
    } else {
    }
    return
  }
  func.func @transform_0(%arg0: i32, %arg1: i32) -> (i32, i32) {
    %c0_i32 = arith.constant 0 : i32
    %c0_i32_0 = arith.constant 0 : i32
    return %arg0, %c0_i32 : i32, i32
  }
  func.func @transform_1(%arg0: i32, %arg1: i32) -> (i32, i32) {
    %c0_i32 = arith.constant 0 : i32
    %c0_i32_0 = arith.constant 0 : i32
    return %arg1, %c0_i32 : i32, i32
  }
  func.func @transform_2(%arg0: i32, %arg1: i32) -> (i32, i32) {
    %c0_i32 = arith.constant 0 : i32
    %c0_i32_0 = arith.constant 0 : i32
    return %arg0, %c0_i32 : i32, i32
  }
  func.func @transform_3(%arg0: i32, %arg1: i32) -> (i32, i32) {
    %c1_i32 = arith.constant 1 : i32
    %0 = arith.addi %arg0, %c1_i32 : i32
    %c2_i32 = arith.constant 2 : i32
    %c0_i32 = arith.constant 0 : i32
    %1 = arith.cmpi eq, %c2_i32, %c0_i32 : i32
    %c1_i32_0 = arith.constant 1 : i32
    %2 = arith.select %1, %c1_i32_0, %c2_i32 : i32
    %3 = arith.remsi %0, %2 : i32
    %c0_i32_1 = arith.constant 0 : i32
    %4 = arith.cmpi ne, %3, %c0_i32_1 : i32
    %c0_i32_2 = arith.constant 0 : i32
    %5 = arith.cmpi slt, %3, %c0_i32_2 : i32
    %c0_i32_3 = arith.constant 0 : i32
    %6 = arith.cmpi slt, %2, %c0_i32_3 : i32
    %7 = arith.xori %5, %6 : i1
    %8 = arith.andi %7, %4 : i1
    %9 = arith.addi %3, %2 : i32
    %10 = arith.select %8, %9, %3 : i32
    %c0_i32_4 = arith.constant 0 : i32
    %c0_i32_5 = arith.constant 0 : i32
    return %10, %c0_i32_4 : i32, i32
  }
  func.func @transform_4(%arg0: i32, %arg1: i32) -> (i32, i32) {
    %c0_i32 = arith.constant 0 : i32
    %c0_i32_0 = arith.constant 0 : i32
    return %arg0, %c0_i32 : i32, i32
  }
}

</mosaic_0001>

<llo_original>
// kernel: tpu_custom_call.1
$region0: #{tpu_custom_call.1}
  #allocation0 [shape = 'u32[]', space=smem, size = 0x4, offset = 0x4, fixed_abs, tag = 'smem constant byte address 0x4 - core index']
  #allocation1 [shape = 'u32[144,128]{1,0:T(1,128)}', space=vmem, size = 0x12000, scoped, tag = 'internal scratch']
  #allocation2 [shape = 'f32[16,1]{1,0:T(8,128)}', space=vmem, size = 0x2000, scoped, tag = 'scratch operand']
  %s0 = inlined_call_operand.hbm [shape: bf16[32,128], index: 0, kind: input, shape index: {}]
  %s1 = inlined_call_operand.hbm [shape: bf16[32,128], index: 1, kind: input, shape index: {}]
  %s2 = inlined_call_operand.hbm [shape: f32[32,128], index: 2, kind: input, shape index: {}]
  %s3 = inlined_call_operand.hbm [shape: f32[32,128], index: 3, kind: input, shape index: {}]
  %s4 = inlined_call_operand.hbm [shape: f32[32,128], index: 4, kind: output, shape index: {}]
  %s5 = sld [smem:[#allocation0]]
  $region73: #{tpu_custom_call.1} parent=0
    _
  %s7 = ssub.s32 1, %s5
  %s8 = scalar_select 0, %s7, %s5
  $region1: #{tpu_custom_call.1} parent=0
    #allocation3 [shape = 'u8[8192]{0}', space=vmem, size = 0x2000, scoped, tag = 'input window, operand 0']
    #allocation4 [shape = 's32[2]{0}', space=sflag, size = 0x8, scoped, tag = 'scoped memory for tpu_custom_call.1']
    #allocation5 [shape = 's32[2]{0}', space=sflag, size = 0x8, scoped, tag = 'scoped memory for tpu_custom_call.1']
    #allocation6 [shape = 'u8[8192]{0}', space=vmem, size = 0x2000, scoped, tag = 'input window, operand 1, single buffered']
    #allocation7 [shape = 's32[1]{0}', space=sflag, size = 0x4, scoped, tag = 'scoped memory for tpu_custom_call.1']
    #allocation8 [shape = 'u8[16384]{0}', space=vmem, size = 0x4000, scoped, tag = 'input window, operand 2']
    #allocation9 [shape = 'u8[16384]{0}', space=vmem, size = 0x4000, scoped, tag = 'input window, operand 3']
    #allocation10 [shape = 'u8[16384]{0}', space=vmem, size = 0x4000, scoped, tag = 'output window, operand 0']
    %9 = vsyncpa [#allocation4], 0
    %s10 = scalar_lea.sflag [#allocation4], 1
    %11 = vsyncpa %s10, 0
    %12 = vsyncpa [#allocation7], 0
    %13 = vsyncpa [#allocation5], 0
    %s14 = scalar_lea.sflag [#allocation5], 1
    %15 = vsyncpa %s14, 0
    loop: start=0, step=1, limit=4
    $region2: #{tpu_custom_call.1} parent=1 // loop_pre_header
      _
    $region3: #{tpu_custom_call.1} parent=1 // loop_header
      %s17 = sphi 0, %s21
      %p18 = scmp.ge.s32.totalorder %s17, 4
      %s24 = sphi 0, %s36
      %s25 = sphi 0, %s32
      %s26 = sphi 0, %s24
      %s27 = sphi 0, %s25
      %s28 = sphi 0, %s26
      %s29 = sphi 0, %s27
      %s39 = sphi 0, %s41
      %s42 = sphi 0, %s39
      %s43 = sphi 0, %s42
      %s59 = sphi 0, %s43
      %s65 = sphi 0, %s67
      %s68 = sphi 0, %s65
      %s69 = sphi 0, %s68
      %s85 = sphi 0, %s69
      %s91 = sphi 0, %s93
      %s94 = sphi 0, %s91
      %s95 = sphi 0, %s94
      %s111 = sphi 0, %s95
      %s143 = sphi 0, %s145
      %s146 = sphi 0, %s143
      %s147 = sphi 0, %s146
      %s163 = sphi 0, %s147
      %s169 = sphi 0, %s171
      %s172 = sphi 0, %s169
      %s173 = sphi 0, %s172
      %s189 = sphi 0, %s173
    $region4: #{tpu_custom_call.1} parent=1 // loop_header_branch
      %20 = sbr.rel (%p18) target = $region8
    $region5: #{tpu_custom_call.1} parent=1 // loop_body
      %s22 = ssub.s32 %s17, 1
      %s23 = ssub.s32 %s17, 2
      %s30 = sadd.s32 1, %s25
      %p31 = scmp.ge.s32.totalorder %s30, 1
      %s32 = scalar_select %p31, 0, %s30
      %s33 = sadd.s32 1, %s24
      %s34 = scalar_select %p31, %s33, %s24
      %p35 = scmp.ge.s32.totalorder %s34, 2
      %s36 = scalar_select %p35, 0, %s34
      %s37 = ssub.s32 %s24, %s36
      %p38 = scmp.eq.s32.totalorder %s37, 0
      %s40 = sadd.s32 %s39, 1
      %s41 = scalar_select %p38, %s39, %s40
      %p44 = pneg %p38
      %p45 = scmp.eq.s32.totalorder %s17, 1
      %p46 = por %p44, %p45
      %p47 = scmp.ne.s32.totalorder %s39, %s42
      %p48 = scmp.eq.s32.totalorder %s17, 0
      %p49 = por %p47, %p48
      %p50 = scmp.ne.s32.totalorder %s39, %s42
      %p51 = scmp.eq.s32.totalorder %s22, 1
      %p52 = por %p50, %p51
      %p53 = scmp.ne.s32.totalorder %s42, %s43
      %p54 = scmp.eq.s32.totalorder %s22, 0
      %p55 = por %p53, %p54
      %p56 = scmp.ne.s32.totalorder %s42, %s43
      %p57 = scmp.eq.s32.totalorder %s23, 1
      %p58 = por %p56, %p57
      %p60 = scmp.ne.s32.totalorder %s43, %s59
      %p61 = scmp.eq.s32.totalorder %s23, 0
      %p62 = por %p60, %p61
      %s63 = ssub.s32 %s25, %s32
      %p64 = scmp.eq.s32.totalorder %s63, 0
      %s66 = sadd.s32 %s65, 1
      %s67 = scalar_select %p64, %s65, %s66
      %p70 = pneg %p64
      %p71 = scmp.eq.s32.totalorder %s17, 1
      %p72 = por %p70, %p71
      %p73 = scmp.ne.s32.totalorder %s65, %s68
      %p74 = scmp.eq.s32.totalorder %s17, 0
      %p75 = por %p73, %p74
      %p76 = scmp.ne.s32.totalorder %s65, %s68
      %p77 = scmp.eq.s32.totalorder %s22, 1
      %p78 = por %p76, %p77
      %p79 = scmp.ne.s32.totalorder %s68, %s69
      %p80 = scmp.eq.s32.totalorder %s22, 0
      %p81 = por %p79, %p80
      %p82 = scmp.ne.s32.totalorder %s68, %s69
      %p83 = scmp.eq.s32.totalorder %s23, 1
      %p84 = por %p82, %p83
      %p86 = scmp.ne.s32.totalorder %s69, %s85
      %p87 = scmp.eq.s32.totalorder %s23, 0
      %p88 = por %p86, %p87
      %s89 = ssub.s32 %s24, %s36
      %p90 = scmp.eq.s32.totalorder %s89, 0
      %s92 = sadd.s32 %s91, 1
      %s93 = scalar_select %p90, %s91, %s92
      %p96 = pneg %p90
      %p97 = scmp.eq.s32.totalorder %s17, 1
      %p98 = por %p96, %p97
      %p99 = scmp.ne.s32.totalorder %s91, %s94
      %p100 = scmp.eq.s32.totalorder %s17, 0
      %p101 = por %p99, %p100
      %p102 = scmp.ne.s32.totalorder %s91, %s94
      %p103 = scmp.eq.s32.totalorder %s22, 1
      %p104 = por %p102, %p103
      %p105 = scmp.ne.s32.totalorder %s94, %s95
      %p106 = scmp.eq.s32.totalorder %s22, 0
      %p107 = por %p105, %p106
      %p108 = scmp.ne.s32.totalorder %s94, %s95
      %p109 = scmp.eq.s32.totalorder %s23, 1
      %p110 = por %p108, %p109
      %p112 = scmp.ne.s32.totalorder %s95, %s111
      %p113 = scmp.eq.s32.totalorder %s23, 0
      %p114 = por %p112, %p113
      %s115 = sadd.s32 %s24, 1
      %p116 = scmp.lt.s32.totalorder %s115, 0
      %s117 = ssub.s32 0, %s115
      %s118 = scalar_select %p116, %s117, %s115
      %s119 = sand.u32 %s118, 1
      %s120 = ssub.s32 0, %s119
      %s121 = scalar_select %p116, %s120, %s119
      %p122 = scmp.ne.s32.totalorder %s121, 0
      %p123 = scmp.lt.s32.totalorder %s121, 0
      %p124 = pnand %p123, %p122
      %p125 = pneg %p124
      %s126 = sadd.s32 %s121, 2
      %s127 = scalar_select %p125, %s126, %s121
      %s128 = sadd.s32 %s36, 1
      %p129 = scmp.lt.s32.totalorder %s128, 0
      %s130 = ssub.s32 0, %s128
      %s131 = scalar_select %p129, %s130, %s128
      %s132 = sand.u32 %s131, 1
      %s133 = ssub.s32 0, %s132
      %s134 = scalar_select %p129, %s133, %s132
      %p135 = scmp.ne.s32.totalorder %s134, 0
      %p136 = scmp.lt.s32.totalorder %s134, 0
      %p137 = pnand %p136, %p135
      %p138 = pneg %p137
      %s139 = sadd.s32 %s134, 2
      %s140 = scalar_select %p138, %s139, %s134
      %s141 = ssub.s32 %s127, %s140
      %p142 = scmp.eq.s32.totalorder %s141, 0
      %s144 = sadd.s32 %s143, 1
      %s145 = scalar_select %p142, %s143, %s144
      %p148 = pneg %p142
      %p149 = scmp.eq.s32.totalorder %s17, 1
      %p150 = por %p148, %p149
      %p151 = scmp.ne.s32.totalorder %s143, %s146
      %p152 = scmp.eq.s32.totalorder %s17, 0
      %p153 = por %p151, %p152
      %p154 = scmp.ne.s32.totalorder %s143, %s146
      %p155 = scmp.eq.s32.totalorder %s22, 1
      %p156 = por %p154, %p155
      %p157 = scmp.ne.s32.totalorder %s146, %s147
      %p158 = scmp.eq.s32.totalorder %s22, 0
      %p159 = por %p157, %p158
      %p160 = scmp.ne.s32.totalorder %s146, %s147
      %p161 = scmp.eq.s32.totalorder %s23, 1
      %p162 = por %p160, %p161
      %p164 = scmp.ne.s32.totalorder %s147, %s163
      %p165 = scmp.eq.s32.totalorder %s23, 0
      %p166 = por %p164, %p165
      %s167 = ssub.s32 %s24, %s36
      %p168 = scmp.eq.s32.totalorder %s167, 0
      %s170 = sadd.s32 %s169, 1
      %s171 = scalar_select %p168, %s169, %s170
      %p174 = pneg %p168
      %p175 = scmp.eq.s32.totalorder %s17, 1
      %p176 = por %p174, %p175
      %p177 = scmp.ne.s32.totalorder %s169, %s172
      %p178 = scmp.eq.s32.totalorder %s17, 0
      %p179 = por %p177, %p178
      %p180 = scmp.ne.s32.totalorder %s169, %s172
      %p181 = scmp.eq.s32.totalorder %s22, 1
      %p182 = por %p180, %p181
      %p183 = scmp.ne.s32.totalorder %s172, %s173
      %p184 = scmp.eq.s32.totalorder %s22, 0
      %p185 = por %p183, %p184
      %p186 = scmp.ne.s32.totalorder %s172, %s173
      %p187 = scmp.eq.s32.totalorder %s23, 1
      %p188 = por %p186, %p187
      %p190 = scmp.ne.s32.totalorder %s173, %s189
      %p191 = scmp.eq.s32.totalorder %s23, 0
      %p192 = por %p190, %p191
      %p193 = scmp.le.s32.totalorder 1, %s17
      %p194 = scmp.lt.s32.totalorder %s17, 3
      %p195 = pnand %p193, %p194
      %p196 = pneg %p195
      // Predicated region
      $region9: #{tpu_custom_call.1} parent=5 // pred_check
        _
      $region10: #{tpu_custom_call.1} parent=5 // pred_check_branch
        %198 = sbr.rel (%p195) target = $region12
      $region11: #{tpu_custom_call.1} parent=5 // pred_region
        %s199 = ssub.s32 %s17, 1
        // Predicated region
        $region13: #{tpu_custom_call.1} parent=11 // pred_check
          %p200 = pneg %p81
        $region14: #{tpu_custom_call.1} parent=11 // pred_check_branch
          %202 = sbr.rel (%p200) target = $region16
        $region15: #{tpu_custom_call.1} parent=11 // pred_region
          %s203 = smul.u32 4, %s27
          %s205 = ssub.s32 256, 256
          %206 = vsyncadd [#allocation7], %s205
          %s207 = smul.addr %s203, 64
          %s208 = scalar_lea.hbm %s1, %s207
          %s209 = sshll.u32 [#allocation6], 4
          %s210 = int_to_ptr.vmem [resolvable:$true] %s209
          %215 = dma.hbm_to_vmem [thread:$0]  %s208, 256, %s210, [#allocation7], 64, 64, 4
        $region16: #{tpu_custom_call.1} parent=11 // pred_fallthru
          _
      $region12: #{tpu_custom_call.1} parent=5 // pred_fallthru
        _
      %p216 = scmp.lt.s32.totalorder %s17, 2
      // Predicated region
      $region17: #{tpu_custom_call.1} parent=5 // pred_check
        %p217 = pneg %p216
      $region18: #{tpu_custom_call.1} parent=5 // pred_check_branch
        %219 = sbr.rel (%p217) target = $region20
      $region19: #{tpu_custom_call.1} parent=5 // pred_region
        // Predicated region
        $region21: #{tpu_custom_call.1} parent=19 // pred_check
          %p220 = pneg %p49
        $region22: #{tpu_custom_call.1} parent=19 // pred_check_branch
          %222 = sbr.rel (%p220) target = $region24
        $region23: #{tpu_custom_call.1} parent=19 // pred_region
          %s223 = sand.u32 %s17, 1
          %s224 = scalar_lea.sflag [#allocation4], %s223
          %s225 = sand.u32 %s39, 1
          %s226 = smul.addr %s225, 8
          %s227 = scalar_lea.vmem [#allocation3], %s226
          %s228 = smul.u32 2, %s24
          %s230 = ssub.s32 128, 128
          %231 = vsyncadd %s224, %s230
          %s232 = smul.addr %s228, 64
          %s233 = scalar_lea.hbm %s0, %s232
          %s234 = sshll.u32 %s227, 4
          %s235 = int_to_ptr.vmem [resolvable:$true] %s234
          %240 = dma.hbm_to_vmem [thread:$0]  %s233, 128, %s235, %s224, 64, 64, 4
        $region24: #{tpu_custom_call.1} parent=19 // pred_fallthru
          _
        // Predicated region
        $region25: #{tpu_custom_call.1} parent=19 // pred_check
          %p241 = pneg %p101
        $region26: #{tpu_custom_call.1} parent=19 // pred_check_branch
          %243 = sbr.rel (%p241) target = $region28
        $region27: #{tpu_custom_call.1} parent=19 // pred_region
          %s244 = sand.u32 %s17, 1
          %s245 = scalar_lea.sflag [#allocation4], %s244
          %s246 = sand.u32 %s91, 1
          %s247 = smul.addr %s246, 16
          %s248 = scalar_lea.vmem [#allocation8], %s247
          %s249 = smul.u32 2, %s24
          %s251 = ssub.s32 256, 256
          %252 = vsyncadd %s245, %s251
          %s253 = smul.addr %s249, 128
          %s254 = scalar_lea.hbm %s2, %s253
          %s255 = sshll.u32 %s248, 4
          %s256 = int_to_ptr.vmem [resolvable:$true] %s255
          %261 = dma.hbm_to_vmem [thread:$0]  %s254, 256, %s256, %s245, 128, 128, 8
        $region28: #{tpu_custom_call.1} parent=19 // pred_fallthru
          _
        // Predicated region
        $region29: #{tpu_custom_call.1} parent=19 // pred_check
          %p262 = pneg %p153
        $region30: #{tpu_custom_call.1} parent=19 // pred_check_branch
          %264 = sbr.rel (%p262) target = $region32
        $region31: #{tpu_custom_call.1} parent=19 // pred_region
          %s265 = sand.u32 %s17, 1
          %s266 = scalar_lea.sflag [#allocation4], %s265
          %s267 = sand.u32 %s143, 1
          %s268 = smul.addr %s267, 16
          %s269 = scalar_lea.vmem [#allocation9], %s268
          %s270 = sadd.s32 %s24, 1
          %p271 = scmp.lt.s32.totalorder %s270, 0
          %s272 = ssub.s32 0, %s270
          %s273 = scalar_select %p271, %s272, %s270
          %s274 = sand.u32 %s273, 1
          %s275 = ssub.s32 0, %s274
          %s276 = scalar_select %p271, %s275, %s274
          %p277 = scmp.ne.s32.totalorder %s276, 0
          %p278 = scmp.lt.s32.totalorder %s276, 0
          %p279 = pnand %p278, %p277
          %p280 = pneg %p279
          %s281 = sadd.s32 %s276, 2
          %s282 = scalar_select %p280, %s281, %s276
          %s283 = smul.u32 2, %s282
          %s285 = ssub.s32 256, 256
          %286 = vsyncadd %s266, %s285
          %s287 = smul.addr %s283, 128
          %s288 = scalar_lea.hbm %s3, %s287
          %s289 = sshll.u32 %s269, 4
          %s290 = int_to_ptr.vmem [resolvable:$true] %s289
          %295 = dma.hbm_to_vmem [thread:$0]  %s288, 256, %s290, %s266, 128, 128, 8
        $region32: #{tpu_custom_call.1} parent=19 // pred_fallthru
          _
      $region20: #{tpu_custom_call.1} parent=5 // pred_fallthru
        _
      %p296 = scmp.le.s32.totalorder 1, %s17
      %p297 = scmp.lt.s32.totalorder %s17, 3
      %p298 = pnand %p296, %p297
      %p299 = pneg %p298
      // Predicated region
      $region33: #{tpu_custom_call.1} parent=5 // pred_check
        _
      $region34: #{tpu_custom_call.1} parent=5 // pred_check_branch
        %301 = sbr.rel (%p298) target = $region36
      $region35: #{tpu_custom_call.1} parent=5 // pred_region
        %s302 = ssub.s32 %s17, 1
        %s303 = sand.u32 %s22, 1
        %s304 = scalar_lea.sflag [#allocation4], %s303
        %s305 = sand.u32 %s42, 1
        %s306 = smul.addr %s305, 8
        %s307 = scalar_lea.vmem [#allocation3], %s306
        // Predicated region
        $region37: #{tpu_custom_call.1} parent=35 // pred_check
          %p308 = pneg %p55
        $region38: #{tpu_custom_call.1} parent=35 // pred_check_branch
          %310 = sbr.rel (%p308) target = $region40
        $region39: #{tpu_custom_call.1} parent=35 // pred_region
          %311 = dma.done %s304, 128
        $region40: #{tpu_custom_call.1} parent=35 // pred_fallthru
          _
        // Predicated region
        $region41: #{tpu_custom_call.1} parent=35 // pred_check
          %p312 = pneg %p81
        $region42: #{tpu_custom_call.1} parent=35 // pred_check_branch
          %314 = sbr.rel (%p312) target = $region44
        $region43: #{tpu_custom_call.1} parent=35 // pred_region
          %315 = dma.done [#allocation7], 256
        $region44: #{tpu_custom_call.1} parent=35 // pred_fallthru
          _
        %s316 = sand.u32 %s22, 1
        %s317 = scalar_lea.sflag [#allocation4], %s316
        %s318 = sand.u32 %s94, 1
        %s319 = smul.addr %s318, 16
        %s320 = scalar_lea.vmem [#allocation8], %s319
        // Predicated region
        $region45: #{tpu_custom_call.1} parent=35 // pred_check
          %p321 = pneg %p107
        $region46: #{tpu_custom_call.1} parent=35 // pred_check_branch
          %323 = sbr.rel (%p321) target = $region48
        $region47: #{tpu_custom_call.1} parent=35 // pred_region
          %324 = dma.done %s317, 256
        $region48: #{tpu_custom_call.1} parent=35 // pred_fallthru
          _
        %s325 = sand.u32 %s22, 1
        %s326 = scalar_lea.sflag [#allocation4], %s325
        %s327 = sand.u32 %s146, 1
        %s328 = smul.addr %s327, 16
        %s329 = scalar_lea.vmem [#allocation9], %s328
        // Predicated region
        $region49: #{tpu_custom_call.1} parent=35 // pred_check
          %p330 = pneg %p159
        $region50: #{tpu_custom_call.1} parent=35 // pred_check_branch
          %332 = sbr.rel (%p330) target = $region52
        $region51: #{tpu_custom_call.1} parent=35 // pred_region
          %333 = dma.done %s326, 256
        $region52: #{tpu_custom_call.1} parent=35 // pred_fallthru
          _
        %s334 = sand.u32 %s22, 1
        %s335 = scalar_lea.sflag [#allocation4], %s334
        %s336 = sand.u32 %s42, 1
        %s337 = smul.addr %s336, 8
        %s338 = scalar_lea.vmem [#allocation3], %s337
        %p339 = pneg %p55
        %p340 = pneg %p52
        %p341 = pneg %p81
        %p342 = pneg %p78
        %s343 = sand.u32 %s22, 1
        %s344 = scalar_lea.sflag [#allocation4], %s343
        %s345 = sand.u32 %s94, 1
        %s346 = smul.addr %s345, 16
        %s347 = scalar_lea.vmem [#allocation8], %s346
        %p348 = pneg %p107
        %p349 = pneg %p104
        %s350 = sand.u32 %s22, 1
        %s351 = scalar_lea.sflag [#allocation4], %s350
        %s352 = sand.u32 %s146, 1
        %s353 = smul.addr %s352, 16
        %s354 = scalar_lea.vmem [#allocation9], %s353
        %p355 = pneg %p159
        %p356 = pneg %p156
        %p357 = pneg %p185
        %p358 = pneg %p182
        %s359 = sand.u32 %s172, 1
        %s360 = scalar_lea.sflag [#allocation5], %s359
        %s361 = sand.u32 %s172, 1
        %s362 = smul.addr %s361, 16
        %s363 = scalar_lea.vmem [#allocation10], %s362
        %s364 = smul.u32 2, %s26
        %s365 = smul.u32 4, %s27
        %s366 = smul.u32 2, %s26
        %s367 = sadd.s32 %s26, 1
        %p368 = scmp.lt.s32.totalorder %s367, 0
        %s369 = ssub.s32 0, %s367
        %s370 = scalar_select %p368, %s369, %s367
        %s371 = sand.u32 %s370, 1
        %s372 = ssub.s32 0, %s371
        %s373 = scalar_select %p368, %s372, %s371
        %p374 = scmp.ne.s32.totalorder %s373, 0
        %p375 = scmp.lt.s32.totalorder %s373, 0
        %p376 = pnand %p375, %p374
        %p377 = pneg %p376
        %s378 = sadd.s32 %s373, 2
        %s379 = scalar_select %p377, %s378, %s373
        %s380 = smul.u32 2, %s379
        %s381 = smul.u32 2, %s26
        %p383 = scmp.eq.s32.totalorder %s27, 0
        // Predicated region
        $region53: #{tpu_custom_call.1} parent=35 // pred_check
          %p384 = pneg %p383
        $region54: #{tpu_custom_call.1} parent=35 // pred_check_branch
          %386 = sbr.rel (%p384) target = $region56
        $region55: #{tpu_custom_call.1} parent=35 // pred_region
          %vm387 = vcmask 7168
          %388 = vst.msk [vmem:[#allocation2] sm:$0xff] %vm387, 0.0
          %389 = vst.msk [vmem:[#allocation2 + $0x8] sm:$0xff] %vm387, 0.0
        $region56: #{tpu_custom_call.1} parent=35 // pred_fallthru
          _
        %v390 = vld [vmem:[%s307] sm:$0xf]
        %v391 = vld [vmem:[%s307 + $0x4] sm:$0xf]
        %v392 = vld [vmem:[#allocation6] sm:$0xf]
        %v393 = vld [vmem:[#allocation6 + $0x4] sm:$0xf]
        %v394 = vld [vmem:[#allocation6 + $0x8] sm:$0xf]
        %v395 = vld [vmem:[#allocation6 + $0xc] sm:$0xf]
        %v398 = vunpack.c.l.b16 %v390
        %v399 = vunpack.c.l.b16 %v391
        %v400 = vpack.c.b16 %v399, %v398
        %v406 = vunpack.c.l.b16 %v392
        %v407 = vunpack.c.l.b16 %v393
        %v408 = vunpack.c.l.b16 %v394
        %v409 = vunpack.c.l.b16 %v395
        %v410 = vpack.c.b16 %v407, %v406
        %v411 = vpack.c.b16 %v409, %v408
        %414 = vmatprep.subr.bf16.mxu0 0
        %415 = vmatpush1.bf16.xpose.msra.mxu0 %v410
        %416 = vmatprep.subr.bf16.mxu0 0
        %417 = vmatpush1.bf16.xpose.msra.mxu0 %v411
        %418 = vmatprep.subr.bf16.mxu0 0
        %419 = vmatpush1.bf16.xpose.msra.mxu0 0
        %420 = vmatprep.subr.bf16.mxu0 0
        %421 = vmatpush1.bf16.xpose.msra.mxu0 0
        %422 = vmatprep.subr.bf16.mxu0 0
        %423 = vmatpush1.bf16.xpose.msra.mxu0 0
        %424 = vmatprep.subr.bf16.mxu0 0
        %425 = vmatpush1.bf16.xpose.msra.mxu0 0
        %426 = vmatprep.subr.bf16.mxu0 0
        %427 = vmatpush1.bf16.xpose.msra.mxu0 0
        %428 = vmatprep.subr.bf16.mxu0 0
        %429 = vmatpush1.bf16.xpose.msra.mxu0 0
        %430 = vmatprep.subr.bf16.mxu0 0
        %431 = vmatpush1.bf16.xpose.msra.mxu0 0
        %432 = vmatprep.subr.bf16.mxu0 0
        %433 = vmatpush1.bf16.xpose.msra.mxu0 0
        %434 = vmatprep.subr.bf16.mxu0 0
        %435 = vmatpush1.bf16.xpose.msra.mxu0 0
        %436 = vmatprep.subr.bf16.mxu0 0
        %437 = vmatpush1.bf16.xpose.msra.mxu0 0
        %438 = vmatprep.subr.bf16.mxu0 0
        %439 = vmatpush1.bf16.xpose.msra.mxu0 0
        %440 = vmatprep.subr.bf16.mxu0 0
        %441 = vmatpush1.bf16.xpose.msra.mxu0 0
        %442 = vmatprep.subr.bf16.mxu0 0
        %443 = vmatpush1.bf16.xpose.msra.mxu0 0
        %444 = vmatprep.subr.bf16.mxu0 0
        %445 = vmatpush1.bf16.xpose.msra.mxu0 0
        %446 = vmatprep.mubr.bf16.mxu0 0
        %447 = vmatmul.mubr.bf16.gmra.mrb[0].mxu0 %v400
        %v448 = vpop.f32.mrb[0].mxu0
        %v449 = vadd.f32 0.0, %v448
        %v450 = vpop.f32.mrb[0].mxu0
        %v451 = vpop.f32.mrb[0].mxu0
        %v452 = vadd.f32 0.0, %v451
        %v453 = vpop.f32.mrb[0].mxu0
        %454 = vdwg.mxu0
        %s455 = smul.u32 %s26, 16
        %s456 = smul.u32 %s27, 32
        %v457 = vlaneseq
        %v458 = vand.u32 %v457, 127
        %v459 = vstv %s456
        %v460 = vadd.s32 %v459, %v458
        %v461 = vlaneseq
        %v462 = vshrl.u32 %v461, 7
        %v463 = vadd.s32 %v462, 8
        %v464 = vstv %s455
        %v465 = vadd.s32 %v464, %v462
        %v466 = vadd.s32 %v464, %v463
        %vm467 = vcmp.ne.s32.totalorder %v460, %v465
        %vm468 = vcmp.ne.s32.totalorder %v460, %v466
        %vm469 = vcmp.lt.s32.totalorder %v460, 12
        %vm470 = vcmp.ge.s32.totalorder %v460, 16
        %vm471 = vcmp.lt.s32.totalorder %v460, 28
        %vm472 = vmand %vm470, %vm471
        %vm473 = vmor %vm469, %vm472
        %vm474 = vmand %vm467, %vm473
        %vm475 = vmand %vm468, %vm473
        %v476 = vsub.f32 %v449, 1.0
        %v477 = vsub.f32 %v452, 1.0
        %v478 = vmul.f32 %v476, 10.0
        %v479 = vmul.f32 %v477, 10.0
        %v480 = vmul.f32 %v478, 1.442695
        %v481 = vpow.pop %v480
        %v482 = vmul.f32 %v479, 1.442695
        %v483 = vpow.pop %v482
        %v484 = vsel %vm474, %v481, 0.0
        %v485 = vsel %vm475, %v483, 0.0
        %v486 = vld [vmem:[#allocation2] sm:$0xff]
        %v487 = vld [vmem:[#allocation2 + $0x8] sm:$0xff]
        %vm488 = vcmask 261120
        %v489 = vsel %vm488, %v484, 0.0
        %490 = vadd.xlane.f32.xlu0 %v489
        %v491 = vpop.xlane.xlu0 %490
        %v492 = vsel %vm488, %v485, 0.0
        %493 = vadd.xlane.f32.xlu0 %v492
        %v494 = vpop.xlane.xlu0 %493
        %v495 = vadd.f32 %v486, %v491
        %v496 = vadd.f32 %v487, %v494
        %vm497 = vcmask 7168
        %498 = vst.msk [vmem:[#allocation2] sm:$0xff] %vm497, %v495
        %499 = vst.msk [vmem:[#allocation2 + $0x8] sm:$0xff] %vm497, %v496
        // Predicated region
        $region57: #{tpu_custom_call.1} parent=35 // pred_check
          %p500 = pneg %p383
        $region58: #{tpu_custom_call.1} parent=35 // pred_check_branch
          %502 = sbr.rel (%p500) target = $region60
        $region59: #{tpu_custom_call.1} parent=35 // pred_region
          %v503 = vld [vmem:[%s320] sm:$0xff]
          %v504 = vld [vmem:[%s320 + $0x8] sm:$0xff]
          %v505 = vld [vmem:[%s329] sm:$0xff]
          %v506 = vld [vmem:[%s329 + $0x8] sm:$0xff]
          %v507 = vmul.f32 %v503, %v505
          %v508 = vmul.f32 %v504, %v506
          %509 = vadd.xlane.f32.xlu0 %v507
          %v510 = vpop.xlane.xlu0 %509
          %511 = vadd.xlane.f32.xlu0 %v508
          %v512 = vpop.xlane.xlu0 %511
          %v513 = vsub.f32 1.0, %v510
          %v514 = vsub.f32 1.0, %v512
          %v515 = vmul.f32 %v513, 10.0
          %v516 = vmul.f32 %v514, 10.0
          %v517 = vld [vmem:[#allocation2] sm:$0xff]
          %v518 = vld [vmem:[#allocation2 + $0x8] sm:$0xff]
          %v519 = vlog2.pop %v517
          %v520 = vmul.f32 %v519, 0.6931472
          %v521 = vlog2.pop %v518
          %v522 = vmul.f32 %v521, 0.6931472
          %v523 = vadd.f32 %v515, %v520
          %v524 = vadd.f32 %v516, %v522
          %vm525 = vcmp.lt.s32.totalorder %v465, 12
          %vm526 = vcmp.lt.s32.totalorder %v466, 12
          %vm527 = vcmp.ge.s32.totalorder %v465, 16
          %vm528 = vcmp.ge.s32.totalorder %v466, 16
          %vm529 = vcmp.lt.s32.totalorder %v465, 28
          %vm530 = vcmp.lt.s32.totalorder %v466, 28
          %vm531 = vmand %vm527, %vm529
          %vm532 = vmand %vm528, %vm530
          %vm533 = vmor %vm525, %vm531
          %vm534 = vmor %vm526, %vm532
          %v535 = vsel %vm533, %v523, 0.0
          %v536 = vsel %vm534, %v524, 0.0
          %538 = vset.pattern.permute.xlu0 0
          %539 = vperm.xlu0 %538, %v535
          %v540 = vpop.permute.xlu0 %539
          %543 = vset.pattern.permute.xlu0 0
          %544 = vperm.xlu0 %543, %v536
          %v545 = vpop.permute.xlu0 %544
          %547 = vst [vmem:[%s363] sm:$0xff] %v540
          %548 = vst [vmem:[%s363 + $0x8] sm:$0xff] %v545
        $region60: #{tpu_custom_call.1} parent=35 // pred_fallthru
          _
        %s549 = sand.u32 %s172, 1
        %s550 = scalar_lea.sflag [#allocation5], %s549
        %s551 = sand.u32 %s172, 1
        %s552 = smul.addr %s551, 16
        %s553 = scalar_lea.vmem [#allocation10], %s552
        // Predicated region
        $region61: #{tpu_custom_call.1} parent=35 // pred_check
          %p554 = pneg %p182
        $region62: #{tpu_custom_call.1} parent=35 // pred_check_branch
          %556 = sbr.rel (%p554) target = $region64
        $region63: #{tpu_custom_call.1} parent=35 // pred_region
          %s557 = smul.u32 2, %s26
          %s559 = ssub.s32 256, 256
          %560 = vsyncadd %s550, %s559
          %s561 = smul.addr %s557, 128
          %s562 = scalar_lea.hbm %s4, %s561
          %s563 = sshll.u32 %s553, 4
          %s564 = int_to_ptr.vmem [resolvable:$true] %s563
          %569 = dma.vmem_to_hbm [thread:$0]  %s564, 256, %s562, %s550, 128, 128, 8
        $region64: #{tpu_custom_call.1} parent=35 // pred_fallthru
          _
      $region36: #{tpu_custom_call.1} parent=5 // pred_fallthru
        _
      %p570 = scmp.le.s32.totalorder 2, %s17
      // Predicated region
      $region65: #{tpu_custom_call.1} parent=5 // pred_check
        %p571 = pneg %p570
      $region66: #{tpu_custom_call.1} parent=5 // pred_check_branch
        %573 = sbr.rel (%p571) target = $region68
      $region67: #{tpu_custom_call.1} parent=5 // pred_region
        %s574 = ssub.s32 %s17, 2
        // Predicated region
        $region69: #{tpu_custom_call.1} parent=67 // pred_check
          %p575 = pneg %p188
        $region70: #{tpu_custom_call.1} parent=67 // pred_check_branch
          %577 = sbr.rel (%p575) target = $region72
        $region71: #{tpu_custom_call.1} parent=67 // pred_region
          %s578 = sand.u32 %s173, 1
          %s579 = scalar_lea.sflag [#allocation5], %s578
          %s580 = sand.u32 %s173, 1
          %s581 = smul.addr %s580, 16
          %s582 = scalar_lea.vmem [#allocation10], %s581
          %583 = dma.done %s579, 256
        $region72: #{tpu_custom_call.1} parent=67 // pred_fallthru
          _
      $region68: #{tpu_custom_call.1} parent=5 // pred_fallthru
        _
    $region6: #{tpu_custom_call.1} parent=1 // loop_footer
      %s21 = sadd.s32 1, %s17
    $region7: #{tpu_custom_call.1} parent=1 // loop_footer_branch
      %16 = sbr.rel target = $region3
    $region8: #{tpu_custom_call.1} parent=1 // loop_exit
      _
    %584 = vsyncpa [#allocation4], 1
    %s585 = scalar_lea.sflag [#allocation4], 1
    %586 = vsyncpa %s585, 1
    %587 = vsyncpa [#allocation7], 1
    %588 = vsyncpa [#allocation5], 1
    %s589 = scalar_lea.sflag [#allocation5], 1
    %590 = vsyncpa %s589, 1

</llo_original>
